<compile_context>
chip_gen: v6e
topology: v6e:2x2x1
jax: 0.10.0
libtpu: 0.0.40
codegen_flags: <defaults>
</compile_context>

<pallas_src>
import jax
import jax.numpy as jnp
from jax import lax
from jax.experimental import pallas as pl
from jax.experimental.pallas import tpu as pltpu


def _round_up(x, m):
    return pl.cdiv(x, m) * m


def _spectral_mul_kernel(xr_ref, xi_ref, wr_ref, wi_ref, or_ref, oi_ref):
    """One mode-tile of out[b,o,m] = sum_i x[b,i,m] * w[i,o,m]  (complex).

    Layouts (contraction axis Cin leading so ref[i] is a cheap leading-dim
    dynamic index):
        xr/xi : (Cin, B,    MT)     wr/wi : (Cin, Cout, MT)
        or/oi : (B,   Cout, MT)
    """
    cin, b, mt = xr_ref.shape
    cout = wr_ref.shape[1]

    def body(i, carry):
        acc_r, acc_i = carry
        # Load one Cin slice; upcast so accumulation is f32 even if the planes
        # are fed in bf16 (v6e/v7x option).
        xr = xr_ref[i].astype(jnp.float32)[:, None, :]      # (B, 1, MT)
        xi = xi_ref[i].astype(jnp.float32)[:, None, :]
        wr = wr_ref[i].astype(jnp.float32)[None, :, :]      # (1, Cout, MT)
        wi = wi_ref[i].astype(jnp.float32)[None, :, :]
        # Gauss / Karatsuba 3-multiply complex product:
        #   real = k1 - k3 ; imag = k1 + k2
        k1 = wr * (xr + xi)
        k2 = xr * (wi - wr)
        k3 = xi * (wr + wi)
        return acc_r + (k1 - k3), acc_i + (k1 + k2)

    zeros = jnp.zeros((b, cout, mt), jnp.float32)
    acc_r, acc_i = lax.fori_loop(0, cin, body, (zeros, zeros), unroll=True)
    or_ref[...] = acc_r
    oi_ref[...] = acc_i


def _spectral_corner_matmul(xr, xi, wr, wi, *, tile):
    """xr/xi: (Cin, B, Mp); wr/wi: (Cin, Cout, Mp); Mp % tile == 0, tile % 128 == 0."""
    cin, b, mp = xr.shape
    cout = wr.shape[1]
    grid_m = mp // tile

    x_spec = pl.BlockSpec((cin, b, tile), lambda m: (0, 0, m))
    w_spec = pl.BlockSpec((cin, cout, tile), lambda m: (0, 0, m))
    o_spec = pl.BlockSpec((b, cout, tile), lambda m: (0, 0, m))

    return pl.pallas_call(
        _spectral_mul_kernel,
        out_shape=(
            jax.ShapeDtypeStruct((b, cout, mp), jnp.float32),
            jax.ShapeDtypeStruct((b, cout, mp), jnp.float32),
        ),
        grid=(grid_m,),
        in_specs=[x_spec, x_spec, w_spec, w_spec],
        out_specs=(o_spec, o_spec),
        compiler_params=pltpu.CompilerParams(
            # Mode-tile axis is fully independent -> shard across TCs (v7x megacore).
            dimension_semantics=("parallel",),
            # Explicit scoped-VMEM budget; fits v7x's 64 MiB physical VMEM.
            vmem_limit_bytes=32 * 1024 * 1024,
        ),
    )(xr, xi, wr, wi)


def spectral_conv3d(x, weights, modes1, modes2, modes3, *,
                    compute_dtype=jnp.float32, mode_tile=512):
    """JAX/Pallas port of SpectralConv3d.forward.

    x       : (B, Cin, D1, D2, D3) float32
    weights : tuple of 4 complex64 arrays, each (Cin, Cout, m1, m2, m3)
    compute_dtype : dtype of the planes fed to the Pallas kernel
                    (jnp.bfloat16 on v6e/v7x halves HBM traffic; keep float32
                    on v5e).  Accumulation inside the kernel is always f32.
    returns : (B, Cout, D1, D2, D3) float32
    """
    B, Cin, D1, D2, D3 = x.shape
    Cout = weights[0].shape[1]
    m1, m2, m3 = modes1, modes2, modes3
    M = m1 * m2 * m3
    M4 = 4 * M

    # TODO(synk): rfftn / irfftn have no Pallas primitive; they stay in XLA.
    x_ft = jnp.fft.rfftn(x, axes=(-3, -2, -1))          # (B, Cin, D1, D2, D3//2+1) c64

    corners = (
        x_ft[:, :, :m1, :m2, :m3],
        x_ft[:, :, D1 - m1:, :m2, :m3],
        x_ft[:, :, :m1, D2 - m2:, :m3],
        x_ft[:, :, D1 - m1:, D2 - m2:, :m3],
    )
    # Fold the 4 corners into one lane-dense flattened mode axis and put the
    # contraction axis (Cin) first so the kernel addresses it with ref[i].
    xc = jnp.concatenate([c.reshape(B, Cin, M) for c in corners], axis=-1)   # (B, Cin, 4M)
    xc = jnp.transpose(xc, (1, 0, 2))                                        # (Cin, B, 4M)
    # NOTE: in a full model the weight planes are static parameters and should
    # be concatenated / split / padded once at init time, not every forward.
    wc = jnp.concatenate([w.reshape(Cin, Cout, M) for w in weights], axis=-1)  # (Cin, Cout, 4M)

    # Pad the mode axis to a multiple of the lane tile (itself a multiple of
    # 128) so every output store is an unmasked, 128-aligned vst.
    tile = min(mode_tile, _round_up(M4, 128))
    mp = _round_up(M4, tile)
    pad = mp - M4
    if pad:
        xc = jnp.pad(xc, ((0, 0), (0, 0), (0, pad)))
        wc = jnp.pad(wc, ((0, 0), (0, 0), (0, pad)))

    or_, oi_ = _spectral_corner_matmul(
        jnp.real(xc).astype(compute_dtype), jnp.imag(xc).astype(compute_dtype),
        jnp.real(wc).astype(compute_dtype), jnp.imag(wc).astype(compute_dtype),
        tile=tile)

    oc = (or_[:, :, :M4] + 1j * oi_[:, :, :M4]).astype(jnp.complex64)
    oc = oc.reshape(B, Cout, 4, m1, m2, m3)

    D3r = D3 // 2 + 1
    out_ft = jnp.zeros((B, Cout, D1, D2, D3r), dtype=jnp.complex64)
    out_ft = out_ft.at[:, :, :m1, :m2, :m3].set(oc[:, :, 0])
    out_ft = out_ft.at[:, :, D1 - m1:, :m2, :m3].set(oc[:, :, 1])
    out_ft = out_ft.at[:, :, :m1, D2 - m2:, :m3].set(oc[:, :, 2])
    out_ft = out_ft.at[:, :, D1 - m1:, D2 - m2:, :m3].set(oc[:, :, 3])

    return jnp.fft.irfftn(out_ft, s=(D1, D2, D3), axes=(-3, -2, -1))


def _reference(x, weights, m1, m2, m3):
    # Pure-JAX reference of the forward pass (for correctness check).
    B, Cin, D1, D2, D3 = x.shape
    Cout = weights[0].shape[1]
    x_ft = jnp.fft.rfftn(x, axes=(-3, -2, -1))
    out_ft = jnp.zeros((B, Cout, D1, D2, D3 // 2 + 1), dtype=jnp.complex64)
    mul = lambda a, w: jnp.einsum('bixyz,ioxyz->boxyz', a, w)
    out_ft = out_ft.at[:, :, :m1, :m2, :m3].set(mul(x_ft[:, :, :m1, :m2, :m3], weights[0]))
    out_ft = out_ft.at[:, :, D1 - m1:, :m2, :m3].set(mul(x_ft[:, :, D1 - m1:, :m2, :m3], weights[1]))
    out_ft = out_ft.at[:, :, :m1, D2 - m2:, :m3].set(mul(x_ft[:, :, :m1, D2 - m2:, :m3], weights[2]))
    out_ft = out_ft.at[:, :, D1 - m1:, D2 - m2:, :m3].set(mul(x_ft[:, :, D1 - m1:, D2 - m2:, :m3], weights[3]))
    return jnp.fft.irfftn(out_ft, s=(D1, D2, D3), axes=(-3, -2, -1))


if __name__ == "__main__":
    # Small shapes consistent with the module.
    B, Cin, Cout = 2, 4, 4
    D1, D2, D3 = 8, 8, 8
    m1, m2, m3 = 4, 4, 3

    key = jax.random.PRNGKey(0)
    kx, *kw = jax.random.split(key, 9)

    x = jax.random.normal(kx, (B, Cin, D1, D2, D3), dtype=jnp.float32)

    # Deterministic parameter init mirroring torch.rand(..., dtype=cfloat) * scale:
    # uniform [0,1) real and imaginary parts scaled by 1/(Cin*Cout).
    scale = 1.0 / (Cin * Cout)
    weights = []
    for i in range(4):
        wr = jax.random.uniform(kw[2 * i], (Cin, Cout, m1, m2, m3), dtype=jnp.float32)
        wi = jax.random.uniform(kw[2 * i + 1], (Cin, Cout, m1, m2, m3), dtype=jnp.float32)
        weights.append((scale * (wr + 1j * wi)).astype(jnp.complex64))
    weights = tuple(weights)

    out = jax.block_until_ready(spectral_conv3d(x, weights, m1, m2, m3))
    ref = jax.block_until_ready(_reference(x, weights, m1, m2, m3))

    assert out.shape == (B, Cout, D1, D2, D3), out.shape
    assert out.dtype == jnp.float32, out.dtype
    assert jnp.allclose(out, ref, atol=1e-5, rtol=1e-5), "mismatch vs pure-JAX reference"
    print("KERNEL_OK")
</pallas_src>

<mosaic_0001>
module attributes {stable_mosaic.version = 11 : i64} {
  func.func @_spectral_mul_kernel(%arg0: i32, %arg1: memref<4x2x256xf32, #tpu.memory_space<vmem>>, %arg2: memref<4x2x256xf32, #tpu.memory_space<vmem>>, %arg3: memref<4x4x256xf32, #tpu.memory_space<vmem>>, %arg4: memref<4x4x256xf32, #tpu.memory_space<vmem>>, %arg5: memref<2x4x256xf32, #tpu.memory_space<vmem>>, %arg6: memref<2x4x256xf32, #tpu.memory_space<vmem>>) attributes {dimension_semantics = [#tpu.dimension_semantics<parallel>], iteration_bounds = array<i64: 1>, scalar_prefetch = 0 : i64, scratch_operands = 0 : i64, tpu.core_type = #tpu.core_type<tc>, window_params = [{transform_indices = @transform_0, window_bounds = array<i64: 4, 2, 256>}, {transform_indices = @transform_1, window_bounds = array<i64: 4, 2, 256>}, {transform_indices = @transform_2, window_bounds = array<i64: 4, 4, 256>}, {transform_indices = @transform_3, window_bounds = array<i64: 4, 4, 256>}, {transform_indices = @transform_4, window_bounds = array<i64: 2, 4, 256>}, {transform_indices = @transform_5, window_bounds = array<i64: 2, 4, 256>}]} {
    %cst = arith.constant 0.000000e+00 : f32
    %0 = vector.broadcast %cst : f32 to vector<2x4x256xf32>
    %c0_i32 = arith.constant 0 : i32
    %1 = arith.index_cast %c0_i32 : i32 to index
    %c0 = arith.constant 0 : index
    %c0_0 = arith.constant 0 : index
    %2 = vector.load %arg1[%1, %c0, %c0_0] : memref<4x2x256xf32, #tpu.memory_space<vmem>>, vector<1x2x256xf32>
    %3 = vector.shape_cast %2 : vector<1x2x256xf32> to vector<2x256xf32>
    %4 = vector.shape_cast %3 : vector<2x256xf32> to vector<2x1x256xf32>
    %5 = arith.index_cast %c0_i32 : i32 to index
    %c0_1 = arith.constant 0 : index
    %c0_2 = arith.constant 0 : index
    %6 = vector.load %arg2[%5, %c0_1, %c0_2] : memref<4x2x256xf32, #tpu.memory_space<vmem>>, vector<1x2x256xf32>
    %7 = vector.shape_cast %6 : vector<1x2x256xf32> to vector<2x256xf32>
    %8 = vector.shape_cast %7 : vector<2x256xf32> to vector<2x1x256xf32>
    %9 = arith.index_cast %c0_i32 : i32 to index
    %c0_3 = arith.constant 0 : index
    %c0_4 = arith.constant 0 : index
    %10 = vector.load %arg3[%9, %c0_3, %c0_4] : memref<4x4x256xf32, #tpu.memory_space<vmem>>, vector<1x4x256xf32>
    %11 = vector.shape_cast %10 : vector<1x4x256xf32> to vector<4x256xf32>
    %12 = vector.shape_cast %11 : vector<4x256xf32> to vector<1x4x256xf32>
    %13 = arith.index_cast %c0_i32 : i32 to index
    %c0_5 = arith.constant 0 : index
    %c0_6 = arith.constant 0 : index
    %14 = vector.load %arg4[%13, %c0_5, %c0_6] : memref<4x4x256xf32, #tpu.memory_space<vmem>>, vector<1x4x256xf32>
    %15 = vector.shape_cast %14 : vector<1x4x256xf32> to vector<4x256xf32>
    %16 = vector.shape_cast %15 : vector<4x256xf32> to vector<1x4x256xf32>
    %17 = arith.addf %4, %8 : vector<2x1x256xf32>
    %18 = vector.broadcast %12 : vector<1x4x256xf32> to vector<2x4x256xf32>
    %19 = vector.broadcast %17 : vector<2x1x256xf32> to vector<2x4x256xf32>
    %20 = arith.mulf %18, %19 : vector<2x4x256xf32>
    %21 = arith.subf %16, %12 : vector<1x4x256xf32>
    %22 = vector.broadcast %4 : vector<2x1x256xf32> to vector<2x4x256xf32>
    %23 = vector.broadcast %21 : vector<1x4x256xf32> to vector<2x4x256xf32>
    %24 = arith.mulf %22, %23 : vector<2x4x256xf32>
    %25 = arith.addf %12, %16 : vector<1x4x256xf32>
    %26 = vector.broadcast %8 : vector<2x1x256xf32> to vector<2x4x256xf32>
    %27 = vector.broadcast %25 : vector<1x4x256xf32> to vector<2x4x256xf32>
    %28 = arith.mulf %26, %27 : vector<2x4x256xf32>
    %29 = arith.subf %20, %28 : vector<2x4x256xf32>
    %30 = arith.addf %0, %29 : vector<2x4x256xf32>
    %31 = arith.addf %20, %24 : vector<2x4x256xf32>
    %32 = arith.addf %0, %31 : vector<2x4x256xf32>
    %c1_i32 = arith.constant 1 : i32
    %33 = arith.index_cast %c1_i32 : i32 to index
    %c0_7 = arith.constant 0 : index
    %c0_8 = arith.constant 0 : index
    %34 = vector.load %arg1[%33, %c0_7, %c0_8] : memref<4x2x256xf32, #tpu.memory_space<vmem>>, vector<1x2x256xf32>
    %35 = vector.shape_cast %34 : vector<1x2x256xf32> to vector<2x256xf32>
    %36 = vector.shape_cast %35 : vector<2x256xf32> to vector<2x1x256xf32>
    %37 = arith.index_cast %c1_i32 : i32 to index
    %c0_9 = arith.constant 0 : index
    %c0_10 = arith.constant 0 : index
    %38 = vector.load %arg2[%37, %c0_9, %c0_10] : memref<4x2x256xf32, #tpu.memory_space<vmem>>, vector<1x2x256xf32>
    %39 = vector.shape_cast %38 : vector<1x2x256xf32> to vector<2x256xf32>
    %40 = vector.shape_cast %39 : vector<2x256xf32> to vector<2x1x256xf32>
    %41 = arith.index_cast %c1_i32 : i32 to index
    %c0_11 = arith.constant 0 : index
    %c0_12 = arith.constant 0 : index
    %42 = vector.load %arg3[%41, %c0_11, %c0_12] : memref<4x4x256xf32, #tpu.memory_space<vmem>>, vector<1x4x256xf32>
    %43 = vector.shape_cast %42 : vector<1x4x256xf32> to vector<4x256xf32>
    %44 = vector.shape_cast %43 : vector<4x256xf32> to vector<1x4x256xf32>
    %45 = arith.index_cast %c1_i32 : i32 to index
    %c0_13 = arith.constant 0 : index
    %c0_14 = arith.constant 0 : index
    %46 = vector.load %arg4[%45, %c0_13, %c0_14] : memref<4x4x256xf32, #tpu.memory_space<vmem>>, vector<1x4x256xf32>
    %47 = vector.shape_cast %46 : vector<1x4x256xf32> to vector<4x256xf32>
    %48 = vector.shape_cast %47 : vector<4x256xf32> to vector<1x4x256xf32>
    %49 = arith.addf %36, %40 : vector<2x1x256xf32>
    %50 = vector.broadcast %44 : vector<1x4x256xf32> to vector<2x4x256xf32>
    %51 = vector.broadcast %49 : vector<2x1x256xf32> to vector<2x4x256xf32>
    %52 = arith.mulf %50, %51 : vector<2x4x256xf32>
    %53 = arith.subf %48, %44 : vector<1x4x256xf32>
    %54 = vector.broadcast %36 : vector<2x1x256xf32> to vector<2x4x256xf32>
    %55 = vector.broadcast %53 : vector<1x4x256xf32> to vector<2x4x256xf32>
    %56 = arith.mulf %54, %55 : vector<2x4x256xf32>
    %57 = arith.addf %44, %48 : vector<1x4x256xf32>
    %58 = vector.broadcast %40 : vector<2x1x256xf32> to vector<2x4x256xf32>
    %59 = vector.broadcast %57 : vector<1x4x256xf32> to vector<2x4x256xf32>
    %60 = arith.mulf %58, %59 : vector<2x4x256xf32>
    %61 = arith.subf %52, %60 : vector<2x4x256xf32>
    %62 = arith.addf %30, %61 : vector<2x4x256xf32>
    %63 = arith.addf %52, %56 : vector<2x4x256xf32>
    %64 = arith.addf %32, %63 : vector<2x4x256xf32>
    %c2_i32 = arith.constant 2 : i32
    %65 = arith.index_cast %c2_i32 : i32 to index
    %c0_15 = arith.constant 0 : index
    %c0_16 = arith.constant 0 : index
    %66 = vector.load %arg1[%65, %c0_15, %c0_16] : memref<4x2x256xf32, #tpu.memory_space<vmem>>, vector<1x2x256xf32>
    %67 = vector.shape_cast %66 : vector<1x2x256xf32> to vector<2x256xf32>
    %68 = vector.shape_cast %67 : vector<2x256xf32> to vector<2x1x256xf32>
    %69 = arith.index_cast %c2_i32 : i32 to index
    %c0_17 = arith.constant 0 : index
    %c0_18 = arith.constant 0 : index
    %70 = vector.load %arg2[%69, %c0_17, %c0_18] : memref<4x2x256xf32, #tpu.memory_space<vmem>>, vector<1x2x256xf32>
    %71 = vector.shape_cast %70 : vector<1x2x256xf32> to vector<2x256xf32>
    %72 = vector.shape_cast %71 : vector<2x256xf32> to vector<2x1x256xf32>
    %73 = arith.index_cast %c2_i32 : i32 to index
    %c0_19 = arith.constant 0 : index
    %c0_20 = arith.constant 0 : index
    %74 = vector.load %arg3[%73, %c0_19, %c0_20] : memref<4x4x256xf32, #tpu.memory_space<vmem>>, vector<1x4x256xf32>
    %75 = vector.shape_cast %74 : vector<1x4x256xf32> to vector<4x256xf32>
    %76 = vector.shape_cast %75 : vector<4x256xf32> to vector<1x4x256xf32>
    %77 = arith.index_cast %c2_i32 : i32 to index
    %c0_21 = arith.constant 0 : index
    %c0_22 = arith.constant 0 : index
    %78 = vector.load %arg4[%77, %c0_21, %c0_22] : memref<4x4x256xf32, #tpu.memory_space<vmem>>, vector<1x4x256xf32>
    %79 = vector.shape_cast %78 : vector<1x4x256xf32> to vector<4x256xf32>
    %80 = vector.shape_cast %79 : vector<4x256xf32> to vector<1x4x256xf32>
    %81 = arith.addf %68, %72 : vector<2x1x256xf32>
    %82 = vector.broadcast %76 : vector<1x4x256xf32> to vector<2x4x256xf32>
    %83 = vector.broadcast %81 : vector<2x1x256xf32> to vector<2x4x256xf32>
    %84 = arith.mulf %82, %83 : vector<2x4x256xf32>
    %85 = arith.subf %80, %76 : vector<1x4x256xf32>
    %86 = vector.broadcast %68 : vector<2x1x256xf32> to vector<2x4x256xf32>
    %87 = vector.broadcast %85 : vector<1x4x256xf32> to vector<2x4x256xf32>
    %88 = arith.mulf %86, %87 : vector<2x4x256xf32>
    %89 = arith.addf %76, %80 : vector<1x4x256xf32>
    %90 = vector.broadcast %72 : vector<2x1x256xf32> to vector<2x4x256xf32>
    %91 = vector.broadcast %89 : vector<1x4x256xf32> to vector<2x4x256xf32>
    %92 = arith.mulf %90, %91 : vector<2x4x256xf32>
    %93 = arith.subf %84, %92 : vector<2x4x256xf32>
    %94 = arith.addf %62, %93 : vector<2x4x256xf32>
    %95 = arith.addf %84, %88 : vector<2x4x256xf32>
    %96 = arith.addf %64, %95 : vector<2x4x256xf32>
    %c3_i32 = arith.constant 3 : i32
    %97 = arith.index_cast %c3_i32 : i32 to index
    %c0_23 = arith.constant 0 : index
    %c0_24 = arith.constant 0 : index
    %98 = vector.load %arg1[%97, %c0_23, %c0_24] : memref<4x2x256xf32, #tpu.memory_space<vmem>>, vector<1x2x256xf32>
    %99 = vector.shape_cast %98 : vector<1x2x256xf32> to vector<2x256xf32>
    %100 = vector.shape_cast %99 : vector<2x256xf32> to vector<2x1x256xf32>
    %101 = arith.index_cast %c3_i32 : i32 to index
    %c0_25 = arith.constant 0 : index
    %c0_26 = arith.constant 0 : index
    %102 = vector.load %arg2[%101, %c0_25, %c0_26] : memref<4x2x256xf32, #tpu.memory_space<vmem>>, vector<1x2x256xf32>
    %103 = vector.shape_cast %102 : vector<1x2x256xf32> to vector<2x256xf32>
    %104 = vector.shape_cast %103 : vector<2x256xf32> to vector<2x1x256xf32>
    %105 = arith.index_cast %c3_i32 : i32 to index
    %c0_27 = arith.constant 0 : index
    %c0_28 = arith.constant 0 : index
    %106 = vector.load %arg3[%105, %c0_27, %c0_28] : memref<4x4x256xf32, #tpu.memory_space<vmem>>, vector<1x4x256xf32>
    %107 = vector.shape_cast %106 : vector<1x4x256xf32> to vector<4x256xf32>
    %108 = vector.shape_cast %107 : vector<4x256xf32> to vector<1x4x256xf32>
    %109 = arith.index_cast %c3_i32 : i32 to index
    %c0_29 = arith.constant 0 : index
    %c0_30 = arith.constant 0 : index
    %110 = vector.load %arg4[%109, %c0_29, %c0_30] : memref<4x4x256xf32, #tpu.memory_space<vmem>>, vector<1x4x256xf32>
    %111 = vector.shape_cast %110 : vector<1x4x256xf32> to vector<4x256xf32>
    %112 = vector.shape_cast %111 : vector<4x256xf32> to vector<1x4x256xf32>
    %113 = arith.addf %100, %104 : vector<2x1x256xf32>
    %114 = vector.broadcast %108 : vector<1x4x256xf32> to vector<2x4x256xf32>
    %115 = vector.broadcast %113 : vector<2x1x256xf32> to vector<2x4x256xf32>
    %116 = arith.mulf %114, %115 : vector<2x4x256xf32>
    %117 = arith.subf %112, %108 : vector<1x4x256xf32>
    %118 = vector.broadcast %100 : vector<2x1x256xf32> to vector<2x4x256xf32>
    %119 = vector.broadcast %117 : vector<1x4x256xf32> to vector<2x4x256xf32>
    %120 = arith.mulf %118, %119 : vector<2x4x256xf32>
    %121 = arith.addf %108, %112 : vector<1x4x256xf32>
    %122 = vector.broadcast %104 : vector<2x1x256xf32> to vector<2x4x256xf32>
    %123 = vector.broadcast %121 : vector<1x4x256xf32> to vector<2x4x256xf32>
    %124 = arith.mulf %122, %123 : vector<2x4x256xf32>
    %125 = arith.subf %116, %124 : vector<2x4x256xf32>
    %126 = arith.addf %94, %125 : vector<2x4x256xf32>
    %127 = arith.addf %116, %120 : vector<2x4x256xf32>
    %128 = arith.addf %96, %127 : vector<2x4x256xf32>
    %c4_i32 = arith.constant 4 : i32
    %c0_31 = arith.constant 0 : index
    %c0_32 = arith.constant 0 : index
    %c0_33 = arith.constant 0 : index
    %129 = vector.load %arg5[%c0_31, %c0_32, %c0_33] : memref<2x4x256xf32, #tpu.memory_space<vmem>>, vector<2x4x256xf32>
    tpu.vector_store %arg5[%c0_31, %c0_32, %c0_33], %126 {strides = array<i32>} : memref<2x4x256xf32, #tpu.memory_space<vmem>>, vector<2x4x256xf32>,
    %c0_34 = arith.constant 0 : index
    %c0_35 = arith.constant 0 : index
    %c0_36 = arith.constant 0 : index
    %130 = vector.load %arg6[%c0_34, %c0_35, %c0_36] : memref<2x4x256xf32, #tpu.memory_space<vmem>>, vector<2x4x256xf32>
    tpu.vector_store %arg6[%c0_34, %c0_35, %c0_36], %128 {strides = array<i32>} : memref<2x4x256xf32, #tpu.memory_space<vmem>>, vector<2x4x256xf32>,
    return
  }
  func.func @transform_0(%arg0: i32) -> (i32, i32, i32) {
    %c0_i32 = arith.constant 0 : i32
    %c0_i32_0 = arith.constant 0 : i32
    %c0_i32_1 = arith.constant 0 : i32
    return %c0_i32, %c0_i32_0, %arg0 : i32, i32, i32
  }
  func.func @transform_1(%arg0: i32) -> (i32, i32, i32) {
    %c0_i32 = arith.constant 0 : i32
    %c0_i32_0 = arith.constant 0 : i32
    %c0_i32_1 = arith.constant 0 : i32
    return %c0_i32, %c0_i32_0, %arg0 : i32, i32, i32
  }
  func.func @transform_2(%arg0: i32) -> (i32, i32, i32) {
    %c0_i32 = arith.constant 0 : i32
    %c0_i32_0 = arith.constant 0 : i32
    %c0_i32_1 = arith.constant 0 : i32
    return %c0_i32, %c0_i32_0, %arg0 : i32, i32, i32
  }
  func.func @transform_3(%arg0: i32) -> (i32, i32, i32) {
    %c0_i32 = arith.constant 0 : i32
    %c0_i32_0 = arith.constant 0 : i32
    %c0_i32_1 = arith.constant 0 : i32
    return %c0_i32, %c0_i32_0, %arg0 : i32, i32, i32
  }
  func.func @transform_4(%arg0: i32) -> (i32, i32, i32) {
    %c0_i32 = arith.constant 0 : i32
    %c0_i32_0 = arith.constant 0 : i32
    %c0_i32_1 = arith.constant 0 : i32
    return %c0_i32, %c0_i32_0, %arg0 : i32, i32, i32
  }
  func.func @transform_5(%arg0: i32) -> (i32, i32, i32) {
    %c0_i32 = arith.constant 0 : i32
    %c0_i32_0 = arith.constant 0 : i32
    %c0_i32_1 = arith.constant 0 : i32
    return %c0_i32, %c0_i32_0, %arg0 : i32, i32, i32
  }
}

</mosaic_0001>

<llo_original>
// kernel: tpu_custom_call.1
$region0: #{tpu_custom_call.1}
  #allocation0 [shape = 'u32[]', space=smem, size = 0x4, offset = 0x4, fixed_abs, tag = 'smem constant byte address 0x4 - core index']
  #allocation1 [shape = 'u32[144,128]{1,0:T(1,128)}', space=vmem, size = 0x12000, scoped, tag = 'internal scratch']
  %s0 = inlined_call_operand.hbm [shape: f32[4,2,256], index: 0, kind: input, shape index: {}]
  %s1 = inlined_call_operand.hbm [shape: f32[4,2,256], index: 1, kind: input, shape index: {}]
  %s2 = inlined_call_operand.hbm [shape: f32[4,4,256], index: 2, kind: input, shape index: {}]
  %s3 = inlined_call_operand.hbm [shape: f32[4,4,256], index: 3, kind: input, shape index: {}]
  %s4 = inlined_call_operand.hbm [shape: f32[2,4,256], index: 4, kind: output, shape index: {0}]
  %s5 = inlined_call_operand.hbm [shape: f32[2,4,256], index: 5, kind: output, shape index: {1}]
  %6 = xla_tuple %s4, %s5
  %s7 = sld [smem:[#allocation0]]
  $region50: #{tpu_custom_call.1} parent=0
    _
  %s9 = ssub.s32 1, %s7
  %s10 = scalar_select 0, %s9, %s7
  $region1: #{tpu_custom_call.1} parent=0
    #allocation2 [shape = 'u8[8192]{0}', space=vmem, size = 0x2000, scoped, tag = 'input window, operand 0, single buffered']
    #allocation3 [shape = 's32[1]{0}', space=sflag, size = 0x4, scoped, tag = 'scoped memory for tpu_custom_call.1']
    #allocation4 [shape = 's32[1]{0}', space=sflag, size = 0x4, scoped, tag = 'scoped memory for tpu_custom_call.1']
    #allocation5 [shape = 'u8[8192]{0}', space=vmem, size = 0x2000, scoped, tag = 'input window, operand 1, single buffered']
    #allocation6 [shape = 's32[1]{0}', space=sflag, size = 0x4, scoped, tag = 'scoped memory for tpu_custom_call.1']
    #allocation7 [shape = 'u8[16384]{0}', space=vmem, size = 0x4000, scoped, tag = 'input window, operand 2, single buffered']
    #allocation8 [shape = 'u8[16384]{0}', space=vmem, size = 0x4000, scoped, tag = 'input window, operand 3, single buffered']
    #allocation9 [shape = 's32[1]{0}', space=sflag, size = 0x4, scoped, tag = 'scoped memory for tpu_custom_call.1']
    #allocation10 [shape = 'u8[8192]{0}', space=vmem, size = 0x2000, scoped, tag = 'output window, operand 0, single buffered']
    #allocation11 [shape = 'u8[8192]{0}', space=vmem, size = 0x2000, scoped, tag = 'output window, operand 1, single buffered']
    #allocation12 [shape = 's32[1]{0}', space=sflag, size = 0x4, scoped, tag = 'scoped memory for tpu_custom_call.1']
    %11 = vsyncpa [#allocation3], 0
    %12 = vsyncpa [#allocation6], 0
    %13 = vsyncpa [#allocation9], 0
    %14 = vsyncpa [#allocation4], 0
    %15 = vsyncpa [#allocation12], 0
    // Predicated region
    $region2: #{tpu_custom_call.1} parent=1 // pred_check
      _
    $region3: #{tpu_custom_call.1} parent=1 // pred_check_branch
      %17 = sbr.rel (0) target = $region5
    $region4: #{tpu_custom_call.1} parent=1 // pred_region
      %s19 = ssub.s32 256, 256
      %20 = vsyncadd [#allocation3], %s19
      %s21 = sshll.u32 [#allocation2], 4
      %s22 = int_to_ptr.vmem [resolvable:$true] %s21
      %27 = dma.hbm_to_vmem [thread:$0]  %s0, 256, %s22, [#allocation3], 64, 64, 4
    $region5: #{tpu_custom_call.1} parent=1 // pred_fallthru
      _
    // Predicated region
    $region6: #{tpu_custom_call.1} parent=1 // pred_check
      _
    $region7: #{tpu_custom_call.1} parent=1 // pred_check_branch
      %29 = sbr.rel (0) target = $region9
    $region8: #{tpu_custom_call.1} parent=1 // pred_region
      %s31 = ssub.s32 256, 256
      %32 = vsyncadd [#allocation6], %s31
      %s33 = sshll.u32 [#allocation5], 4
      %s34 = int_to_ptr.vmem [resolvable:$true] %s33
      %39 = dma.hbm_to_vmem [thread:$0]  %s1, 256, %s34, [#allocation6], 64, 64, 4
    $region9: #{tpu_custom_call.1} parent=1 // pred_fallthru
      _
    // Predicated region
    $region10: #{tpu_custom_call.1} parent=1 // pred_check
      _
    $region11: #{tpu_custom_call.1} parent=1 // pred_check_branch
      %41 = sbr.rel (0) target = $region13
    $region12: #{tpu_custom_call.1} parent=1 // pred_region
      %s43 = ssub.s32 512, 512
      %44 = vsyncadd [#allocation6], %s43
      %s45 = sshll.u32 [#allocation7], 4
      %s46 = int_to_ptr.vmem [resolvable:$true] %s45
      %51 = dma.hbm_to_vmem [thread:$0]  %s2, 512, %s46, [#allocation6], 128, 128, 8
    $region13: #{tpu_custom_call.1} parent=1 // pred_fallthru
      _
    // Predicated region
    $region14: #{tpu_custom_call.1} parent=1 // pred_check
      _
    $region15: #{tpu_custom_call.1} parent=1 // pred_check_branch
      %53 = sbr.rel (0) target = $region17
    $region16: #{tpu_custom_call.1} parent=1 // pred_region
      %s55 = ssub.s32 512, 512
      %56 = vsyncadd [#allocation9], %s55
      %s57 = sshll.u32 [#allocation8], 4
      %s58 = int_to_ptr.vmem [resolvable:$true] %s57
      %63 = dma.hbm_to_vmem [thread:$0]  %s3, 512, %s58, [#allocation9], 128, 128, 8
    $region17: #{tpu_custom_call.1} parent=1 // pred_fallthru
      _
    // Predicated region
    $region18: #{tpu_custom_call.1} parent=1 // pred_check
      _
    $region19: #{tpu_custom_call.1} parent=1 // pred_check_branch
      %65 = sbr.rel (0) target = $region21
    $region20: #{tpu_custom_call.1} parent=1 // pred_region
      %66 = dma.done [#allocation3], 256
    $region21: #{tpu_custom_call.1} parent=1 // pred_fallthru
      _
    // Predicated region
    $region22: #{tpu_custom_call.1} parent=1 // pred_check
      _
    $region23: #{tpu_custom_call.1} parent=1 // pred_check_branch
      %68 = sbr.rel (0) target = $region25
    $region24: #{tpu_custom_call.1} parent=1 // pred_region
      %69 = dma.done [#allocation6], 256
    $region25: #{tpu_custom_call.1} parent=1 // pred_fallthru
      _
    // Predicated region
    $region26: #{tpu_custom_call.1} parent=1 // pred_check
      _
    $region27: #{tpu_custom_call.1} parent=1 // pred_check_branch
      %71 = sbr.rel (0) target = $region29
    $region28: #{tpu_custom_call.1} parent=1 // pred_region
      %72 = dma.done [#allocation6], 512
    $region29: #{tpu_custom_call.1} parent=1 // pred_fallthru
      _
    // Predicated region
    $region30: #{tpu_custom_call.1} parent=1 // pred_check
      _
    $region31: #{tpu_custom_call.1} parent=1 // pred_check_branch
      %74 = sbr.rel (0) target = $region33
    $region32: #{tpu_custom_call.1} parent=1 // pred_region
      %75 = dma.done [#allocation9], 512
    $region33: #{tpu_custom_call.1} parent=1 // pred_fallthru
      _
    %v76 = vld [vmem:[#allocation2] sm:$0xf]
    %v79 = vunpack.c.l.s4 1966171168
    %v80 = vunpack.c.0.s8 %v79
    %v81 = vlaneseq
    %v82 = vshrl.u32 %v81, 7
    %v83 = vsub.s32 %v80, %v82
    %v84 = vrot.slane %v76, %v83
    %v85 = vcombine.high %v84, %v84
    %v88 = vld [vmem:[#allocation5] sm:$0xf]
    %v91 = vunpack.c.l.s4 1966171168
    %v92 = vunpack.c.0.s8 %v91
    %v93 = vlaneseq
    %v94 = vshrl.u32 %v93, 7
    %v95 = vsub.s32 %v92, %v94
    %v96 = vrot.slane %v88, %v95
    %v97 = vcombine.high %v96, %v96
    %v100 = vld [vmem:[#allocation7] sm:$0xff]
    %v101 = vld [vmem:[#allocation8] sm:$0xff]
    %v102 = vadd.f32 %v84, %v96
    %v103 = vadd.f32 %v85, %v97
    %v106 = vlaneseq
    %v107 = vshrl.u32 %v106, 7
    %v108 = vsub.s32 0, %v107
    %v109 = vrot.slane %v102, %v108
    %v110 = vlaneseq
    %v111 = vshrl.u32 %v110, 7
    %v112 = vsub.s32 1, %v111
    %v113 = vrot.slane %v102, %v112
    %v114 = vlaneseq
    %v115 = vshrl.u32 %v114, 7
    %v116 = vsub.s32 0, %v115
    %v117 = vrot.slane %v103, %v116
    %v118 = vlaneseq
    %v119 = vshrl.u32 %v118, 7
    %v120 = vsub.s32 1, %v119
    %v121 = vrot.slane %v103, %v120
    %v122 = vcombine.low %v109, %v113
    %v123 = vcombine.low %v117, %v121
    %v126 = vmul.f32 %v100, %v122
    %v127 = vmul.f32 %v100, %v123
    %v128 = vsub.f32 %v101, %v100
    %v129 = vlaneseq
    %v130 = vshrl.u32 %v129, 7
    %v131 = vsub.s32 0, %v130
    %v132 = vrot.slane %v84, %v131
    %v133 = vlaneseq
    %v134 = vshrl.u32 %v133, 7
    %v135 = vsub.s32 1, %v134
    %v136 = vrot.slane %v84, %v135
    %v137 = vlaneseq
    %v138 = vshrl.u32 %v137, 7
    %v139 = vsub.s32 0, %v138
    %v140 = vrot.slane %v85, %v139
    %v141 = vlaneseq
    %v142 = vshrl.u32 %v141, 7
    %v143 = vsub.s32 1, %v142
    %v144 = vrot.slane %v85, %v143
    %v150 = vcombine.high %v128, %v128
    %v152 = vmul.f32 %v132, %v128
    %v153 = vmul.f32 %v136, %v150
    %v154 = vmul.f32 %v140, %v128
    %v155 = vmul.f32 %v144, %v150
    %v156 = vadd.f32 %v100, %v101
    %v157 = vlaneseq
    %v158 = vshrl.u32 %v157, 7
    %v159 = vsub.s32 0, %v158
    %v160 = vrot.slane %v96, %v159
    %v161 = vlaneseq
    %v162 = vshrl.u32 %v161, 7
    %v163 = vsub.s32 1, %v162
    %v164 = vrot.slane %v96, %v163
    %v165 = vlaneseq
    %v166 = vshrl.u32 %v165, 7
    %v167 = vsub.s32 0, %v166
    %v168 = vrot.slane %v97, %v167
    %v169 = vlaneseq
    %v170 = vshrl.u32 %v169, 7
    %v171 = vsub.s32 1, %v170
    %v172 = vrot.slane %v97, %v171
    %v178 = vcombine.high %v156, %v156
    %v180 = vmul.f32 %v160, %v156
    %v181 = vmul.f32 %v164, %v178
    %v182 = vmul.f32 %v168, %v156
    %v183 = vmul.f32 %v172, %v178
    %v188 = vcombine.low %v180, %v181
    %v189 = vcombine.low %v182, %v183
    %v192 = vsub.f32 %v126, %v188
    %v193 = vsub.f32 %v127, %v189
    %v194 = vadd.f32 %v192, 0.0
    %v195 = vadd.f32 %v193, 0.0
    %v200 = vcombine.low %v152, %v153
    %v201 = vcombine.low %v154, %v155
    %v204 = vadd.f32 %v126, %v200
    %v205 = vadd.f32 %v127, %v201
    %v206 = vadd.f32 %v204, 0.0
    %v207 = vadd.f32 %v205, 0.0
    %s208 = scalar_lea.vmem [#allocation2], 4
    %v209 = vld [vmem:[%s208] sm:$0xf]
    %v212 = vunpack.c.l.s4 1966171168
    %v213 = vunpack.c.0.s8 %v212
    %v214 = vlaneseq
    %v215 = vshrl.u32 %v214, 7
    %v216 = vsub.s32 %v213, %v215
    %v217 = vrot.slane %v209, %v216
    %v218 = vcombine.high %v217, %v217
    %s221 = scalar_lea.vmem [#allocation5], 4
    %v222 = vld [vmem:[%s221] sm:$0xf]
    %v225 = vunpack.c.l.s4 1966171168
    %v226 = vunpack.c.0.s8 %v225
    %v227 = vlaneseq
    %v228 = vshrl.u32 %v227, 7
    %v229 = vsub.s32 %v226, %v228
    %v230 = vrot.slane %v222, %v229
    %v231 = vcombine.high %v230, %v230
    %s234 = scalar_lea.vmem [#allocation7], 8
    %v235 = vld [vmem:[%s234] sm:$0xff]
    %s236 = scalar_lea.vmem [#allocation8], 8
    %v237 = vld [vmem:[%s236] sm:$0xff]
    %v238 = vadd.f32 %v217, %v230
    %v239 = vadd.f32 %v218, %v231
    %v242 = vlaneseq
    %v243 = vshrl.u32 %v242, 7
    %v244 = vsub.s32 0, %v243
    %v245 = vrot.slane %v238, %v244
    %v246 = vlaneseq
    %v247 = vshrl.u32 %v246, 7
    %v248 = vsub.s32 1, %v247
    %v249 = vrot.slane %v238, %v248
    %v250 = vlaneseq
    %v251 = vshrl.u32 %v250, 7
    %v252 = vsub.s32 0, %v251
    %v253 = vrot.slane %v239, %v252
    %v254 = vlaneseq
    %v255 = vshrl.u32 %v254, 7
    %v256 = vsub.s32 1, %v255
    %v257 = vrot.slane %v239, %v256
    %v258 = vcombine.low %v245, %v249
    %v259 = vcombine.low %v253, %v257
    %v262 = vmul.f32 %v235, %v258
    %v263 = vmul.f32 %v235, %v259
    %v264 = vsub.f32 %v237, %v235
    %v265 = vlaneseq
    %v266 = vshrl.u32 %v265, 7
    %v267 = vsub.s32 0, %v266
    %v268 = vrot.slane %v217, %v267
    %v269 = vlaneseq
    %v270 = vshrl.u32 %v269, 7
    %v271 = vsub.s32 1, %v270
    %v272 = vrot.slane %v217, %v271
    %v273 = vlaneseq
    %v274 = vshrl.u32 %v273, 7
    %v275 = vsub.s32 0, %v274
    %v276 = vrot.slane %v218, %v275
    %v277 = vlaneseq
    %v278 = vshrl.u32 %v277, 7
    %v279 = vsub.s32 1, %v278
    %v280 = vrot.slane %v218, %v279
    %v286 = vcombine.high %v264, %v264
    %v288 = vmul.f32 %v268, %v264
    %v289 = vmul.f32 %v272, %v286
    %v290 = vmul.f32 %v276, %v264
    %v291 = vmul.f32 %v280, %v286
    %v292 = vadd.f32 %v235, %v237
    %v293 = vlaneseq
    %v294 = vshrl.u32 %v293, 7
    %v295 = vsub.s32 0, %v294
    %v296 = vrot.slane %v230, %v295
    %v297 = vlaneseq
    %v298 = vshrl.u32 %v297, 7
    %v299 = vsub.s32 1, %v298
    %v300 = vrot.slane %v230, %v299
    %v301 = vlaneseq
    %v302 = vshrl.u32 %v301, 7
    %v303 = vsub.s32 0, %v302
    %v304 = vrot.slane %v231, %v303
    %v305 = vlaneseq
    %v306 = vshrl.u32 %v305, 7
    %v307 = vsub.s32 1, %v306
    %v308 = vrot.slane %v231, %v307
    %v314 = vcombine.high %v292, %v292
    %v316 = vmul.f32 %v296, %v292
    %v317 = vmul.f32 %v300, %v314
    %v318 = vmul.f32 %v304, %v292
    %v319 = vmul.f32 %v308, %v314
    %v324 = vcombine.low %v316, %v317
    %v325 = vcombine.low %v318, %v319
    %v328 = vsub.f32 %v262, %v324
    %v329 = vsub.f32 %v263, %v325
    %v330 = vadd.f32 %v194, %v328
    %v331 = vadd.f32 %v195, %v329
    %v336 = vcombine.low %v288, %v289
    %v337 = vcombine.low %v290, %v291
    %v340 = vadd.f32 %v262, %v336
    %v341 = vadd.f32 %v263, %v337
    %v342 = vadd.f32 %v206, %v340
    %v343 = vadd.f32 %v207, %v341
    %s344 = scalar_lea.vmem [#allocation2], 8
    %v345 = vld [vmem:[%s344] sm:$0xf]
    %v348 = vunpack.c.l.s4 1966171168
    %v349 = vunpack.c.0.s8 %v348
    %v350 = vlaneseq
    %v351 = vshrl.u32 %v350, 7
    %v352 = vsub.s32 %v349, %v351
    %v353 = vrot.slane %v345, %v352
    %v354 = vcombine.high %v353, %v353
    %s357 = scalar_lea.vmem [#allocation5], 8
    %v358 = vld [vmem:[%s357] sm:$0xf]
    %v361 = vunpack.c.l.s4 1966171168
    %v362 = vunpack.c.0.s8 %v361
    %v363 = vlaneseq
    %v364 = vshrl.u32 %v363, 7
    %v365 = vsub.s32 %v362, %v364
    %v366 = vrot.slane %v358, %v365
    %v367 = vcombine.high %v366, %v366
    %s370 = scalar_lea.vmem [#allocation7], 16
    %v371 = vld [vmem:[%s370] sm:$0xff]
    %s372 = scalar_lea.vmem [#allocation8], 16
    %v373 = vld [vmem:[%s372] sm:$0xff]
    %v374 = vadd.f32 %v353, %v366
    %v375 = vadd.f32 %v354, %v367
    %v378 = vlaneseq
    %v379 = vshrl.u32 %v378, 7
    %v380 = vsub.s32 0, %v379
    %v381 = vrot.slane %v374, %v380
    %v382 = vlaneseq
    %v383 = vshrl.u32 %v382, 7
    %v384 = vsub.s32 1, %v383
    %v385 = vrot.slane %v374, %v384
    %v386 = vlaneseq
    %v387 = vshrl.u32 %v386, 7
    %v388 = vsub.s32 0, %v387
    %v389 = vrot.slane %v375, %v388
    %v390 = vlaneseq
    %v391 = vshrl.u32 %v390, 7
    %v392 = vsub.s32 1, %v391
    %v393 = vrot.slane %v375, %v392
    %v394 = vcombine.low %v381, %v385
    %v395 = vcombine.low %v389, %v393
    %v398 = vmul.f32 %v371, %v394
    %v399 = vmul.f32 %v371, %v395
    %v400 = vsub.f32 %v373, %v371
    %v401 = vlaneseq
    %v402 = vshrl.u32 %v401, 7
    %v403 = vsub.s32 0, %v402
    %v404 = vrot.slane %v353, %v403
    %v405 = vlaneseq
    %v406 = vshrl.u32 %v405, 7
    %v407 = vsub.s32 1, %v406
    %v408 = vrot.slane %v353, %v407
    %v409 = vlaneseq
    %v410 = vshrl.u32 %v409, 7
    %v411 = vsub.s32 0, %v410
    %v412 = vrot.slane %v354, %v411
    %v413 = vlaneseq
    %v414 = vshrl.u32 %v413, 7
    %v415 = vsub.s32 1, %v414
    %v416 = vrot.slane %v354, %v415
    %v422 = vcombine.high %v400, %v400
    %v424 = vmul.f32 %v404, %v400
    %v425 = vmul.f32 %v408, %v422
    %v426 = vmul.f32 %v412, %v400
    %v427 = vmul.f32 %v416, %v422
    %v428 = vadd.f32 %v371, %v373
    %v429 = vlaneseq
    %v430 = vshrl.u32 %v429, 7
    %v431 = vsub.s32 0, %v430
    %v432 = vrot.slane %v366, %v431
    %v433 = vlaneseq
    %v434 = vshrl.u32 %v433, 7
    %v435 = vsub.s32 1, %v434
    %v436 = vrot.slane %v366, %v435
    %v437 = vlaneseq
    %v438 = vshrl.u32 %v437, 7
    %v439 = vsub.s32 0, %v438
    %v440 = vrot.slane %v367, %v439
    %v441 = vlaneseq
    %v442 = vshrl.u32 %v441, 7
    %v443 = vsub.s32 1, %v442
    %v444 = vrot.slane %v367, %v443
    %v450 = vcombine.high %v428, %v428
    %v452 = vmul.f32 %v432, %v428
    %v453 = vmul.f32 %v436, %v450
    %v454 = vmul.f32 %v440, %v428
    %v455 = vmul.f32 %v444, %v450
    %v460 = vcombine.low %v452, %v453
    %v461 = vcombine.low %v454, %v455
    %v464 = vsub.f32 %v398, %v460
    %v465 = vsub.f32 %v399, %v461
    %v466 = vadd.f32 %v330, %v464
    %v467 = vadd.f32 %v331, %v465
    %v472 = vcombine.low %v424, %v425
    %v473 = vcombine.low %v426, %v427
    %v476 = vadd.f32 %v398, %v472
    %v477 = vadd.f32 %v399, %v473
    %v478 = vadd.f32 %v342, %v476
    %v479 = vadd.f32 %v343, %v477
    %s480 = scalar_lea.vmem [#allocation2], 12
    %v481 = vld [vmem:[%s480] sm:$0xf]
    %v484 = vunpack.c.l.s4 1966171168
    %v485 = vunpack.c.0.s8 %v484
    %v486 = vlaneseq
    %v487 = vshrl.u32 %v486, 7
    %v488 = vsub.s32 %v485, %v487
    %v489 = vrot.slane %v481, %v488
    %v490 = vcombine.high %v489, %v489
    %s493 = scalar_lea.vmem [#allocation5], 12
    %v494 = vld [vmem:[%s493] sm:$0xf]
    %v497 = vunpack.c.l.s4 1966171168
    %v498 = vunpack.c.0.s8 %v497
    %v499 = vlaneseq
    %v500 = vshrl.u32 %v499, 7
    %v501 = vsub.s32 %v498, %v500
    %v502 = vrot.slane %v494, %v501
    %v503 = vcombine.high %v502, %v502
    %s506 = scalar_lea.vmem [#allocation7], 24
    %v507 = vld [vmem:[%s506] sm:$0xff]
    %s508 = scalar_lea.vmem [#allocation8], 24
    %v509 = vld [vmem:[%s508] sm:$0xff]
    %v510 = vadd.f32 %v489, %v502
    %v511 = vadd.f32 %v490, %v503
    %v514 = vlaneseq
    %v515 = vshrl.u32 %v514, 7
    %v516 = vsub.s32 0, %v515
    %v517 = vrot.slane %v510, %v516
    %v518 = vlaneseq
    %v519 = vshrl.u32 %v518, 7
    %v520 = vsub.s32 1, %v519
    %v521 = vrot.slane %v510, %v520
    %v522 = vlaneseq
    %v523 = vshrl.u32 %v522, 7
    %v524 = vsub.s32 0, %v523
    %v525 = vrot.slane %v511, %v524
    %v526 = vlaneseq
    %v527 = vshrl.u32 %v526, 7
    %v528 = vsub.s32 1, %v527
    %v529 = vrot.slane %v511, %v528
    %v530 = vcombine.low %v517, %v521
    %v531 = vcombine.low %v525, %v529
    %v534 = vmul.f32 %v507, %v530
    %v535 = vmul.f32 %v507, %v531
    %v536 = vsub.f32 %v509, %v507
    %v537 = vlaneseq
    %v538 = vshrl.u32 %v537, 7
    %v539 = vsub.s32 0, %v538
    %v540 = vrot.slane %v489, %v539
    %v541 = vlaneseq
    %v542 = vshrl.u32 %v541, 7
    %v543 = vsub.s32 1, %v542
    %v544 = vrot.slane %v489, %v543
    %v545 = vlaneseq
    %v546 = vshrl.u32 %v545, 7
    %v547 = vsub.s32 0, %v546
    %v548 = vrot.slane %v490, %v547
    %v549 = vlaneseq
    %v550 = vshrl.u32 %v549, 7
    %v551 = vsub.s32 1, %v550
    %v552 = vrot.slane %v490, %v551
    %v558 = vcombine.high %v536, %v536
    %v560 = vmul.f32 %v540, %v536
    %v561 = vmul.f32 %v544, %v558
    %v562 = vmul.f32 %v548, %v536
    %v563 = vmul.f32 %v552, %v558
    %v564 = vadd.f32 %v507, %v509
    %v565 = vlaneseq
    %v566 = vshrl.u32 %v565, 7
    %v567 = vsub.s32 0, %v566
    %v568 = vrot.slane %v502, %v567
    %v569 = vlaneseq
    %v570 = vshrl.u32 %v569, 7
    %v571 = vsub.s32 1, %v570
    %v572 = vrot.slane %v502, %v571
    %v573 = vlaneseq
    %v574 = vshrl.u32 %v573, 7
    %v575 = vsub.s32 0, %v574
    %v576 = vrot.slane %v503, %v575
    %v577 = vlaneseq
    %v578 = vshrl.u32 %v577, 7
    %v579 = vsub.s32 1, %v578
    %v580 = vrot.slane %v503, %v579
    %v586 = vcombine.high %v564, %v564
    %v588 = vmul.f32 %v568, %v564
    %v589 = vmul.f32 %v572, %v586
    %v590 = vmul.f32 %v576, %v564
    %v591 = vmul.f32 %v580, %v586
    %v596 = vcombine.low %v588, %v589
    %v597 = vcombine.low %v590, %v591
    %v600 = vsub.f32 %v534, %v596
    %v601 = vsub.f32 %v535, %v597
    %v602 = vadd.f32 %v466, %v600
    %v603 = vadd.f32 %v467, %v601
    %v608 = vcombine.low %v560, %v561
    %v609 = vcombine.low %v562, %v563
    %v612 = vadd.f32 %v534, %v608
    %v613 = vadd.f32 %v535, %v609
    %v614 = vadd.f32 %v478, %v612
    %v615 = vadd.f32 %v479, %v613
    %616 = vst [vmem:[#allocation10] sm:$0xff] %v602
    %617 = vst [vmem:[#allocation10 + $0x8] sm:$0xff] %v603
    %618 = vst [vmem:[#allocation11] sm:$0xff] %v614
    %619 = vst [vmem:[#allocation11 + $0x8] sm:$0xff] %v615
    // Predicated region
    $region34: #{tpu_custom_call.1} parent=1 // pred_check
      _
    $region35: #{tpu_custom_call.1} parent=1 // pred_check_branch
      %621 = sbr.rel (0) target = $region37
    $region36: #{tpu_custom_call.1} parent=1 // pred_region
      %s623 = ssub.s32 256, 256
      %624 = vsyncadd [#allocation4], %s623
      %s625 = sshll.u32 [#allocation10], 4
      %s626 = int_to_ptr.vmem [resolvable:$true] %s625
      %631 = dma.vmem_to_hbm [thread:$0]  %s626, 256, %s4, [#allocation4], 128, 128, 8
    $region37: #{tpu_custom_call.1} parent=1 // pred_fallthru
      _
    // Predicated region
    $region38: #{tpu_custom_call.1} parent=1 // pred_check
      _
    $region39: #{tpu_custom_call.1} parent=1 // pred_check_branch
      %633 = sbr.rel (0) target = $region41
    $region40: #{tpu_custom_call.1} parent=1 // pred_region
      %s635 = ssub.s32 256, 256
      %636 = vsyncadd [#allocation12], %s635
      %s637 = sshll.u32 [#allocation11], 4
      %s638 = int_to_ptr.vmem [resolvable:$true] %s637
      %643 = dma.vmem_to_hbm [thread:$0]  %s638, 256, %s5, [#allocation12], 128, 128, 8
    $region41: #{tpu_custom_call.1} parent=1 // pred_fallthru
      _
    // Predicated region
    $region42: #{tpu_custom_call.1} parent=1 // pred_check
      _
    $region43: #{tpu_custom_call.1} parent=1 // pred_check_branch
      %645 = sbr.rel (0) target = $region45
    $region44: #{tpu_custom_call.1} parent=1 // pred_region
      %646 = dma.done [#allocation4], 256
    $region45: #{tpu_custom_call.1} parent=1 // pred_fallthru
      _
    // Predicated region
    $region46: #{tpu_custom_call.1} parent=1 // pred_check
      _
    $region47: #{tpu_custom_call.1} parent=1 // pred_check_branch
      %648 = sbr.rel (0) target = $region49
    $region48: #{tpu_custom_call.1} parent=1 // pred_region
      %649 = dma.done [#allocation12], 256
    $region49: #{tpu_custom_call.1} parent=1 // pred_fallthru
      _
    %650 = vsyncpa [#allocation3], 1
    %651 = vsyncpa [#allocation6], 1
    %652 = vsyncpa [#allocation9], 1
    %653 = vsyncpa [#allocation4], 1
    %654 = vsyncpa [#allocation12], 1

</llo_original>
